<compile_context>
chip_gen: v7x
topology: tpu7x:2x2x1
jax: 0.10.0
libtpu: 0.0.40
codegen_flags: <defaults>
</compile_context>

<pallas_src>
from functools import partial

import jax
import jax.numpy as jnp
from jax.experimental import pallas as pl
from jax.experimental.pallas import tpu as pltpu


def gate_kernel(x_ref, wmap_ref, pool_ref, poolt_ref, o_ref, *, k):
    """Fused gate for `bt` batch elements.

    x_ref:     (bt, C, HW)  input block (original dtype)
    wmap_ref:  (C, HW)      gating kernel tiled over the spatial grid (f32)
    pool_ref:  (HW, P)      0/1 patch-pooling matrix (f32), resident
    poolt_ref: (P, HW)      its transpose (f32), resident
    o_ref:     (bt, C, HW)  gated output block (original dtype)
    """
    x = x_ref[...]
    xf = x.astype(jnp.float32)                                   # widen in-register only

    # --- conv scores (computed exactly once) ---------------------------------
    # elementwise multiply by the tiled weights (VPU), reduce over C (sublanes),
    # then collapse each KHxKW patch with the pooling matmul on the MXU.
    z = jnp.sum(xf * wmap_ref[...][None, :, :], axis=1)          # (bt, HW)
    scores = jnp.dot(z, pool_ref[...],
                     preferred_element_type=jnp.float32)         # (bt, P)

    # TODO(synk): optional gating_activation (None in the default config) would
    # be applied to `scores` here, before the top-k.

    # --- vectorized rank-based top-k per batch row ----------------------------
    # rank[b, p] = #{q : scores[b, q] > scores[b, p]}; keep iff rank < k
    # (== "score >= k-th largest"; ties at the boundary are all kept).
    # TODO(synk): torch.topk keeps exactly k entries on exact ties; this rule
    # keeps all tied entries instead.
    gt = (scores[:, None, :] > scores[:, :, None]).astype(jnp.float32)  # (bt, P, P)
    rank = jnp.sum(gt, axis=2)                                   # (bt, P)
    gate = jnp.where(rank < k, scores, 0.0)                      # (bt, P)

    # --- broadcast gate back over the KHxKW footprint and fuse the multiply ---
    gate_hw = jnp.dot(gate, poolt_ref[...],
                      preferred_element_type=jnp.float32)        # (bt, HW)
    o_ref[...] = (xf * gate_hw[:, None, :]).astype(o_ref.dtype)


def _pick_block_batch(batch, C, HW, itemsize, vmem_budget=12 * 1024 * 1024):
    """Largest divisor of `batch` whose per-step VMEM footprint fits the budget.

    Footprint per batch element: double-buffered input block + double-buffered
    output block (in the input dtype) + roughly one f32 intermediate.  The
    12 MiB default leaves headroom under the 16 MiB (v5e) / 32 MiB (v6e, v7x)
    default scoped VMEM limits.  On single-TC v5e/v6e fewer, larger grid steps
    are strictly better; on v7x >=2 steps would let both TensorCores work, but
    for tiny batches a single larger step is still preferred.
    """
    per_elem = C * HW * (2 * itemsize + 2 * itemsize + 4)
    bt_max = max(1, vmem_budget // per_elem)
    divisors = [d for d in range(1, batch + 1) if batch % d == 0 and d <= bt_max]
    return max(divisors) if divisors else 1


@partial(jax.jit, static_argnums=2)
def gate_forward(inputs, weight, k):
    """inputs: (B, C, H, W) NCHW, weight: (1, C, KH, KW); stride=KH/KW, pad=0."""
    B, C, H, W = inputs.shape
    _, Cw, KH, KW = weight.shape
    # Kernel assumes stride == kernel_size and padding == 0 (the only
    # shape-consistent config of the reference module).
    assert C == Cw and H % KH == 0 and W % KW == 0
    Ho, Wo = H // KH, W // KW
    P, HW = Ho * Wo, H * W

    # Free reshape: NCHW is contiguous over (H, W), so (B, C, H*W) is a view
    # with a lane-dense last dim (multiple of 128) -- no HBM transpose.
    x2 = inputs.reshape(B, C, HW)

    # Tiny VMEM-resident constants (built once by XLA, negligible traffic):
    #   wmap[c, h*W + w] = weight[0, c, h % KH, w % KW]
    wmap = jnp.tile(weight[0], (Ho, Wo)).reshape(C, HW).astype(jnp.float32)
    #   pool[h*W + w, ho*Wo + wo] = 1 iff (h//KH, w//KW) == (ho, wo)
    hw_idx = jnp.arange(HW)
    patch_of_hw = (hw_idx // W // KH) * Wo + (hw_idx % W) // KW          # (HW,)
    pool = (patch_of_hw[:, None] == jnp.arange(P)[None, :]).astype(jnp.float32)
    poolt = jnp.transpose(pool)                                          # (P, HW)

    bt = _pick_block_batch(B, C, HW, inputs.dtype.itemsize)
    grid = (B // bt,)

    out2 = pl.pallas_call(
        partial(gate_kernel, k=k),
        out_shape=jax.ShapeDtypeStruct((B, C, HW), inputs.dtype),
        grid_spec=pltpu.PrefetchScalarGridSpec(
            num_scalar_prefetch=0,
            grid=grid,
            in_specs=[
                pl.BlockSpec((bt, C, HW), lambda i: (i, 0, 0)),
                pl.BlockSpec((C, HW), lambda i: (0, 0)),     # resident constant
                pl.BlockSpec((HW, P), lambda i: (0, 0)),     # resident constant
                pl.BlockSpec((P, HW), lambda i: (0, 0)),     # resident constant
            ],
            out_specs=pl.BlockSpec((bt, C, HW), lambda i: (i, 0, 0)),
        ),
        compiler_params=pltpu.CompilerParams(
            dimension_semantics=("parallel",),
            vmem_limit_bytes=32 * 1024 * 1024),
    )(x2, wmap, pool, poolt)

    # Free reshape back to NCHW; the gating multiply already happened in-kernel.
    return out2.reshape(B, C, H, W)


def gate_reference(inputs, weight, k):
    """Pure-JAX reference mirroring the PyTorch forward (no ties assumed)."""
    KH, KW = weight.shape[2], weight.shape[3]
    g = jax.lax.conv_general_dilated(
        inputs, weight, window_strides=(KH, KW), padding="VALID",
        dimension_numbers=("NCHW", "OIHW", "NCHW"))          # (B, 1, Ho, Wo)
    B, c, h, w = g.shape
    flat = g.reshape(B, c, h * w)
    kth = jnp.sort(flat, axis=-1)[..., -k][..., None]
    gate = jnp.where(flat >= kth, flat, 0.0).reshape(B, c, h, w)
    up = jnp.repeat(jnp.repeat(gate, KH, axis=2), KW, axis=3)
    up = jnp.repeat(up, inputs.shape[1], axis=1)
    return inputs * up


if __name__ == "__main__":
    key = jax.random.PRNGKey(0)
    kx, kw = jax.random.split(key)

    B, C, H, W = 2, 128, 16, 16          # C=128 fixed by the gating-kernel shape
    k = 4                                 # keep top-4 of the 16 conv positions

    x = jax.random.normal(kx, (B, C, H, W), dtype=jnp.float32)
    # init.normal_(gating_kernel, mean=0.0, std=0.0001), shape (1, 128, 4, 4)
    gating_kernel = 1e-4 * jax.random.normal(kw, (1, C, 4, 4), dtype=jnp.float32)

    out = gate_forward(x, gating_kernel, k)
    out = jax.block_until_ready(out)

    ref = gate_reference(x, gating_kernel, k)
    assert out.shape == x.shape
    assert jnp.allclose(out, ref, rtol=1e-4, atol=1e-5), "mismatch vs reference"

    print("KERNEL_OK")
</pallas_src>

<mosaic_0001>
module attributes {stable_mosaic.version = 11 : i64} {
  func.func @gate_kernel(%arg0: i32, %arg1: memref<2x128x256xf32, #tpu.memory_space<vmem>>, %arg2: memref<128x256xf32, #tpu.memory_space<vmem>>, %arg3: memref<256x16xf32, #tpu.memory_space<vmem>>, %arg4: memref<16x256xf32, #tpu.memory_space<vmem>>, %arg5: memref<2x128x256xf32, #tpu.memory_space<vmem>>) attributes {dimension_semantics = [#tpu.dimension_semantics<parallel>], iteration_bounds = array<i64: 1>, scalar_prefetch = 0 : i64, scratch_operands = 0 : i64, tpu.core_type = #tpu.core_type<tc>, window_params = [{transform_indices = @transform_0, window_bounds = array<i64: 2, 128, 256>}, {pipeline_mode = #tpu.pipeline_mode<synchronous>, transform_indices = @transform_1, window_bounds = array<i64: 128, 256>}, {pipeline_mode = #tpu.pipeline_mode<synchronous>, transform_indices = @transform_2, window_bounds = array<i64: 256, 16>}, {pipeline_mode = #tpu.pipeline_mode<synchronous>, transform_indices = @transform_3, window_bounds = array<i64: 16, 256>}, {transform_indices = @transform_4, window_bounds = array<i64: 2, 128, 256>}]} {
    %c0 = arith.constant 0 : index
    %c0_0 = arith.constant 0 : index
    %c0_1 = arith.constant 0 : index
    %0 = vector.load %arg1[%c0, %c0_0, %c0_1] : memref<2x128x256xf32, #tpu.memory_space<vmem>>, vector<2x128x256xf32>
    %c0_2 = arith.constant 0 : index
    %c0_3 = arith.constant 0 : index
    %1 = vector.load %arg2[%c0_2, %c0_3] : memref<128x256xf32, #tpu.memory_space<vmem>>, vector<128x256xf32>
    %2 = vector.shape_cast %1 : vector<128x256xf32> to vector<1x128x256xf32>
    %3 = vector.broadcast %2 : vector<1x128x256xf32> to vector<2x128x256xf32>
    %4 = arith.mulf %0, %3 : vector<2x128x256xf32>
    %cst = arith.constant dense<0.000000e+00> : vector<2x256xf32>
    %5 = vector.multi_reduction <add>, %4, %cst [1] : vector<2x128x256xf32> to vector<2x256xf32>
    %c0_4 = arith.constant 0 : index
    %c0_5 = arith.constant 0 : index
    %6 = vector.load %arg3[%c0_4, %c0_5] : memref<256x16xf32, #tpu.memory_space<vmem>>, vector<256x16xf32>
    %cst_6 = arith.constant dense<0.000000e+00> : vector<2x16xf32>
    %7 = tpu.matmul %5, %6, %cst_6 {dimension_numbers = #tpu.dot_dimension_numbers<[1], [0], [0], [1], [0, 0, 1, 1], [], []>} : vector<2x256xf32>, vector<256x16xf32>, vector<2x16xf32> -> vector<2x16xf32>
    %8 = vector.shape_cast %7 : vector<2x16xf32> to vector<2x1x16xf32>
    %9 = vector.shape_cast %7 : vector<2x16xf32> to vector<2x16x1xf32>
    %10 = vector.broadcast %8 : vector<2x1x16xf32> to vector<2x16x16xf32>
    %11 = vector.broadcast %9 : vector<2x16x1xf32> to vector<2x16x16xf32>
    %12 = arith.cmpf ogt, %10, %11 : vector<2x16x16xf32>
    %13 = arith.extui %12 : vector<2x16x16xi1> to vector<2x16x16xi32>
    %14 = arith.sitofp %13 : vector<2x16x16xi32> to vector<2x16x16xf32>
    %cst_7 = arith.constant dense<0.000000e+00> : vector<2x16xf32>
    %15 = vector.multi_reduction <add>, %14, %cst_7 [2] : vector<2x16x16xf32> to vector<2x16xf32>
    %cst_8 = arith.constant 4.000000e+00 : f32
    %16 = vector.broadcast %cst_8 : f32 to vector<2x16xf32>
    %17 = arith.cmpf olt, %15, %16 : vector<2x16xf32>
    %cst_9 = arith.constant 0.000000e+00 : f32
    %18 = vector.broadcast %cst_9 : f32 to vector<2x16xf32>
    %19 = arith.select %17, %7, %18 : vector<2x16xi1>, vector<2x16xf32>
    %c0_10 = arith.constant 0 : index
    %c0_11 = arith.constant 0 : index
    %20 = vector.load %arg4[%c0_10, %c0_11] : memref<16x256xf32, #tpu.memory_space<vmem>>, vector<16x256xf32>
    %cst_12 = arith.constant dense<0.000000e+00> : vector<2x256xf32>
    %21 = tpu.matmul %19, %20, %cst_12 {dimension_numbers = #tpu.dot_dimension_numbers<[1], [0], [0], [1], [0, 0, 1, 1], [], []>} : vector<2x16xf32>, vector<16x256xf32>, vector<2x256xf32> -> vector<2x256xf32>
    %22 = vector.shape_cast %21 : vector<2x256xf32> to vector<2x1x256xf32>
    %23 = vector.broadcast %22 : vector<2x1x256xf32> to vector<2x128x256xf32>
    %24 = arith.mulf %0, %23 : vector<2x128x256xf32>
    %c0_13 = arith.constant 0 : index
    %c0_14 = arith.constant 0 : index
    %c0_15 = arith.constant 0 : index
    %25 = vector.load %arg5[%c0_13, %c0_14, %c0_15] : memref<2x128x256xf32, #tpu.memory_space<vmem>>, vector<2x128x256xf32>
    tpu.vector_store %arg5[%c0_13, %c0_14, %c0_15], %24 {strides = array<i32>} : memref<2x128x256xf32, #tpu.memory_space<vmem>>, vector<2x128x256xf32>,
    return
  }
  func.func @transform_0(%arg0: i32) -> (i32, i32, i32) {
    %c0_i32 = arith.constant 0 : i32
    %c0_i32_0 = arith.constant 0 : i32
    %c0_i32_1 = arith.constant 0 : i32
    return %arg0, %c0_i32, %c0_i32_0 : i32, i32, i32
  }
  func.func @transform_1(%arg0: i32) -> (i32, i32) {
    %c0_i32 = arith.constant 0 : i32
    %c0_i32_0 = arith.constant 0 : i32
    %c0_i32_1 = arith.constant 0 : i32
    return %c0_i32, %c0_i32_0 : i32, i32
  }
  func.func @transform_2(%arg0: i32) -> (i32, i32) {
    %c0_i32 = arith.constant 0 : i32
    %c0_i32_0 = arith.constant 0 : i32
    %c0_i32_1 = arith.constant 0 : i32
    return %c0_i32, %c0_i32_0 : i32, i32
  }
  func.func @transform_3(%arg0: i32) -> (i32, i32) {
    %c0_i32 = arith.constant 0 : i32
    %c0_i32_0 = arith.constant 0 : i32
    %c0_i32_1 = arith.constant 0 : i32
    return %c0_i32, %c0_i32_0 : i32, i32
  }
  func.func @transform_4(%arg0: i32) -> (i32, i32, i32) {
    %c0_i32 = arith.constant 0 : i32
    %c0_i32_0 = arith.constant 0 : i32
    %c0_i32_1 = arith.constant 0 : i32
    return %arg0, %c0_i32, %c0_i32_0 : i32, i32, i32
  }
}

</mosaic_0001>

<llo_original>
// kernel: gate_forward.1
$region0: #{gate_forward.1}
  #allocation0 [shape = 'u32[]', space=smem, size = 0x4, offset = 0x4, fixed_abs, tag = 'smem constant byte address 0x4 - core index']
  #allocation1 [shape = 'u32[144,128]{1,0:T(1,128)}', space=vmem, size = 0x12000, scoped, tag = 'internal scratch']
  %s0 = inlined_call_operand.vmem [shape: f32[2,128,256], index: 0, kind: input, shape index: {}]
  %s1 = inlined_call_operand.vmem [shape: f32[128,256], index: 1, kind: input, shape index: {}]
  %s2 = inlined_call_operand.vmem [shape: f32[256,16], index: 2, kind: input, shape index: {}]
  %s3 = inlined_call_operand.vmem [shape: f32[16,256], index: 3, kind: input, shape index: {}]
  %s4 = inlined_call_operand.vmem [shape: f32[2,128,256], index: 4, kind: output, shape index: {}]
  %s5 = sld [smem:[#allocation0]]
  $region26: #{gate_forward.1} parent=0
    _
  %s7 = ssub.s32 1, %s5
  %s8 = scalar_select 0, %s7, %s5
  // Predicated region
  $region2: #{gate_forward.1} parent=0 // pred_check
    _
  $region3: #{gate_forward.1} parent=0 // pred_check_branch
    %10 = sbr.rel (0) target = $region5
  $region4: #{gate_forward.1} parent=0 // pred_region
    _
  $region5: #{gate_forward.1} parent=0 // pred_fallthru
    _
  // Predicated region
  $region6: #{gate_forward.1} parent=0 // pred_check
    _
  $region7: #{gate_forward.1} parent=0 // pred_check_branch
    %12 = sbr.rel (0) target = $region9
  $region8: #{gate_forward.1} parent=0 // pred_region
    _
  $region9: #{gate_forward.1} parent=0 // pred_fallthru
    _
  // Predicated region
  $region10: #{gate_forward.1} parent=0 // pred_check
    _
  $region11: #{gate_forward.1} parent=0 // pred_check_branch
    %14 = sbr.rel (0) target = $region13
  $region12: #{gate_forward.1} parent=0 // pred_region
    _
  $region13: #{gate_forward.1} parent=0 // pred_fallthru
    _
  // Predicated region
  $region14: #{gate_forward.1} parent=0 // pred_check
    _
  $region15: #{gate_forward.1} parent=0 // pred_check_branch
    %16 = sbr.rel (0) target = $region17
  $region16: #{gate_forward.1} parent=0 // pred_region
    _
  $region17: #{gate_forward.1} parent=0 // pred_fallthru
    _
  %v17 = vld [vmem:[%s0] sm:$0xff]
  %v18 = vld [vmem:[%s0 + $0x8] sm:$0xff]
  %v19 = vld [vmem:[%s0 + $0x10] sm:$0xff]
  %v20 = vld [vmem:[%s0 + $0x18] sm:$0xff]
  %v21 = vld [vmem:[%s0 + $0x20] sm:$0xff]
  %v22 = vld [vmem:[%s0 + $0x28] sm:$0xff]
  %v23 = vld [vmem:[%s0 + $0x30] sm:$0xff]
  %v24 = vld [vmem:[%s0 + $0x38] sm:$0xff]
  %v25 = vld [vmem:[%s0 + $0x40] sm:$0xff]
  %v26 = vld [vmem:[%s0 + $0x48] sm:$0xff]
  %v27 = vld [vmem:[%s0 + $0x50] sm:$0xff]
  %v28 = vld [vmem:[%s0 + $0x58] sm:$0xff]
  %v29 = vld [vmem:[%s0 + $0x60] sm:$0xff]
  %v30 = vld [vmem:[%s0 + $0x68] sm:$0xff]
  %v31 = vld [vmem:[%s0 + $0x70] sm:$0xff]
  %v32 = vld [vmem:[%s0 + $0x78] sm:$0xff]
  %v33 = vld [vmem:[%s0 + $0x80] sm:$0xff]
  %v34 = vld [vmem:[%s0 + $0x88] sm:$0xff]
  %v35 = vld [vmem:[%s0 + $0x90] sm:$0xff]
  %v36 = vld [vmem:[%s0 + $0x98] sm:$0xff]
  %v37 = vld [vmem:[%s0 + $0xa0] sm:$0xff]
  %v38 = vld [vmem:[%s0 + $0xa8] sm:$0xff]
  %v39 = vld [vmem:[%s0 + $0xb0] sm:$0xff]
  %v40 = vld [vmem:[%s0 + $0xb8] sm:$0xff]
  %v41 = vld [vmem:[%s0 + $0xc0] sm:$0xff]
  %v42 = vld [vmem:[%s0 + $0xc8] sm:$0xff]
  %v43 = vld [vmem:[%s0 + $0xd0] sm:$0xff]
  %v44 = vld [vmem:[%s0 + $0xd8] sm:$0xff]
  %v45 = vld [vmem:[%s0 + $0xe0] sm:$0xff]
  %v46 = vld [vmem:[%s0 + $0xe8] sm:$0xff]
  %v47 = vld [vmem:[%s0 + $0xf0] sm:$0xff]
  %v48 = vld [vmem:[%s0 + $0xf8] sm:$0xff]
  %v49 = vld [vmem:[%s0 + $0x100] sm:$0xff]
  %v50 = vld [vmem:[%s0 + $0x108] sm:$0xff]
  %v51 = vld [vmem:[%s0 + $0x110] sm:$0xff]
  %v52 = vld [vmem:[%s0 + $0x118] sm:$0xff]
  %v53 = vld [vmem:[%s0 + $0x120] sm:$0xff]
  %v54 = vld [vmem:[%s0 + $0x128] sm:$0xff]
  %v55 = vld [vmem:[%s0 + $0x130] sm:$0xff]
  %v56 = vld [vmem:[%s0 + $0x138] sm:$0xff]
  %v57 = vld [vmem:[%s0 + $0x140] sm:$0xff]
  %v58 = vld [vmem:[%s0 + $0x148] sm:$0xff]
  %v59 = vld [vmem:[%s0 + $0x150] sm:$0xff]
  %v60 = vld [vmem:[%s0 + $0x158] sm:$0xff]
  %v61 = vld [vmem:[%s0 + $0x160] sm:$0xff]
  %v62 = vld [vmem:[%s0 + $0x168] sm:$0xff]
  %v63 = vld [vmem:[%s0 + $0x170] sm:$0xff]
  %v64 = vld [vmem:[%s0 + $0x178] sm:$0xff]
  %v65 = vld [vmem:[%s0 + $0x180] sm:$0xff]
  %v66 = vld [vmem:[%s0 + $0x188] sm:$0xff]
  %v67 = vld [vmem:[%s0 + $0x190] sm:$0xff]
  %v68 = vld [vmem:[%s0 + $0x198] sm:$0xff]
  %v69 = vld [vmem:[%s0 + $0x1a0] sm:$0xff]
  %v70 = vld [vmem:[%s0 + $0x1a8] sm:$0xff]
  %v71 = vld [vmem:[%s0 + $0x1b0] sm:$0xff]
  %v72 = vld [vmem:[%s0 + $0x1b8] sm:$0xff]
  %v73 = vld [vmem:[%s0 + $0x1c0] sm:$0xff]
  %v74 = vld [vmem:[%s0 + $0x1c8] sm:$0xff]
  %v75 = vld [vmem:[%s0 + $0x1d0] sm:$0xff]
  %v76 = vld [vmem:[%s0 + $0x1d8] sm:$0xff]
  %v77 = vld [vmem:[%s0 + $0x1e0] sm:$0xff]
  %v78 = vld [vmem:[%s0 + $0x1e8] sm:$0xff]
  %v79 = vld [vmem:[%s0 + $0x1f0] sm:$0xff]
  %v80 = vld [vmem:[%s0 + $0x1f8] sm:$0xff]
  %v81 = vld [vmem:[%s1] sm:$0xff]
  %v82 = vld [vmem:[%s1 + $0x8] sm:$0xff]
  %v83 = vld [vmem:[%s1 + $0x10] sm:$0xff]
  %v84 = vld [vmem:[%s1 + $0x18] sm:$0xff]
  %v85 = vld [vmem:[%s1 + $0x20] sm:$0xff]
  %v86 = vld [vmem:[%s1 + $0x28] sm:$0xff]
  %v87 = vld [vmem:[%s1 + $0x30] sm:$0xff]
  %v88 = vld [vmem:[%s1 + $0x38] sm:$0xff]
  %v89 = vld [vmem:[%s1 + $0x40] sm:$0xff]
  %v90 = vld [vmem:[%s1 + $0x48] sm:$0xff]
  %v91 = vld [vmem:[%s1 + $0x50] sm:$0xff]
  %v92 = vld [vmem:[%s1 + $0x58] sm:$0xff]
  %v93 = vld [vmem:[%s1 + $0x60] sm:$0xff]
  %v94 = vld [vmem:[%s1 + $0x68] sm:$0xff]
  %v95 = vld [vmem:[%s1 + $0x70] sm:$0xff]
  %v96 = vld [vmem:[%s1 + $0x78] sm:$0xff]
  %v97 = vld [vmem:[%s1 + $0x80] sm:$0xff]
  %v98 = vld [vmem:[%s1 + $0x88] sm:$0xff]
  %v99 = vld [vmem:[%s1 + $0x90] sm:$0xff]
  %v100 = vld [vmem:[%s1 + $0x98] sm:$0xff]
  %v101 = vld [vmem:[%s1 + $0xa0] sm:$0xff]
  %v102 = vld [vmem:[%s1 + $0xa8] sm:$0xff]
  %v103 = vld [vmem:[%s1 + $0xb0] sm:$0xff]
  %v104 = vld [vmem:[%s1 + $0xb8] sm:$0xff]
  %v105 = vld [vmem:[%s1 + $0xc0] sm:$0xff]
  %v106 = vld [vmem:[%s1 + $0xc8] sm:$0xff]
  %v107 = vld [vmem:[%s1 + $0xd0] sm:$0xff]
  %v108 = vld [vmem:[%s1 + $0xd8] sm:$0xff]
  %v109 = vld [vmem:[%s1 + $0xe0] sm:$0xff]
  %v110 = vld [vmem:[%s1 + $0xe8] sm:$0xff]
  %v111 = vld [vmem:[%s1 + $0xf0] sm:$0xff]
  %v112 = vld [vmem:[%s1 + $0xf8] sm:$0xff]
  %v113 = vmul.f32 %v17, %v81
  %v114 = vmul.f32 %v18, %v82
  %v115 = vmul.f32 %v19, %v83
  %v116 = vmul.f32 %v20, %v84
  %v117 = vmul.f32 %v21, %v85
  %v118 = vmul.f32 %v22, %v86
  %v119 = vmul.f32 %v23, %v87
  %v120 = vmul.f32 %v24, %v88
  %v121 = vmul.f32 %v25, %v89
  %v122 = vmul.f32 %v26, %v90
  %v123 = vmul.f32 %v27, %v91
  %v124 = vmul.f32 %v28, %v92
  %v125 = vmul.f32 %v29, %v93
  %v126 = vmul.f32 %v30, %v94
  %v127 = vmul.f32 %v31, %v95
  %v128 = vmul.f32 %v32, %v96
  %v129 = vmul.f32 %v33, %v97
  %v130 = vmul.f32 %v34, %v98
  %v131 = vmul.f32 %v35, %v99
  %v132 = vmul.f32 %v36, %v100
  %v133 = vmul.f32 %v37, %v101
  %v134 = vmul.f32 %v38, %v102
  %v135 = vmul.f32 %v39, %v103
  %v136 = vmul.f32 %v40, %v104
  %v137 = vmul.f32 %v41, %v105
  %v138 = vmul.f32 %v42, %v106
  %v139 = vmul.f32 %v43, %v107
  %v140 = vmul.f32 %v44, %v108
  %v141 = vmul.f32 %v45, %v109
  %v142 = vmul.f32 %v46, %v110
  %v143 = vmul.f32 %v47, %v111
  %v144 = vmul.f32 %v48, %v112
  %v145 = vmul.f32 %v49, %v81
  %v146 = vmul.f32 %v50, %v82
  %v147 = vmul.f32 %v51, %v83
  %v148 = vmul.f32 %v52, %v84
  %v149 = vmul.f32 %v53, %v85
  %v150 = vmul.f32 %v54, %v86
  %v151 = vmul.f32 %v55, %v87
  %v152 = vmul.f32 %v56, %v88
  %v153 = vmul.f32 %v57, %v89
  %v154 = vmul.f32 %v58, %v90
  %v155 = vmul.f32 %v59, %v91
  %v156 = vmul.f32 %v60, %v92
  %v157 = vmul.f32 %v61, %v93
  %v158 = vmul.f32 %v62, %v94
  %v159 = vmul.f32 %v63, %v95
  %v160 = vmul.f32 %v64, %v96
  %v161 = vmul.f32 %v65, %v97
  %v162 = vmul.f32 %v66, %v98
  %v163 = vmul.f32 %v67, %v99
  %v164 = vmul.f32 %v68, %v100
  %v165 = vmul.f32 %v69, %v101
  %v166 = vmul.f32 %v70, %v102
  %v167 = vmul.f32 %v71, %v103
  %v168 = vmul.f32 %v72, %v104
  %v169 = vmul.f32 %v73, %v105
  %v170 = vmul.f32 %v74, %v106
  %v171 = vmul.f32 %v75, %v107
  %v172 = vmul.f32 %v76, %v108
  %v173 = vmul.f32 %v77, %v109
  %v174 = vmul.f32 %v78, %v110
  %v175 = vmul.f32 %v79, %v111
  %v176 = vmul.f32 %v80, %v112
  %v177 = vadd.f32 %v113, %v115
  %v178 = vadd.f32 %v177, %v117
  %v179 = vadd.f32 %v178, %v119
  %v180 = vadd.f32 %v179, %v121
  %v181 = vadd.f32 %v180, %v123
  %v182 = vadd.f32 %v181, %v125
  %v183 = vadd.f32 %v182, %v127
  %v184 = vadd.f32 %v183, %v129
  %v185 = vadd.f32 %v184, %v131
  %v186 = vadd.f32 %v185, %v133
  %v187 = vadd.f32 %v186, %v135
  %v188 = vadd.f32 %v187, %v137
  %v189 = vadd.f32 %v188, %v139
  %v190 = vadd.f32 %v189, %v141
  %v191 = vadd.f32 %v190, %v143
  %v192 = vrot.slane %v191, 4
  %v193 = vadd.f32 %v191, %v192
  %v194 = vrot.slane %v193, 2
  %v195 = vadd.f32 %v193, %v194
  %v196 = vrot.slane %v195, 1
  %v197 = vadd.f32 %v195, %v196
  %v198 = vadd.f32 %v114, %v116
  %v199 = vadd.f32 %v198, %v118
  %v200 = vadd.f32 %v199, %v120
  %v201 = vadd.f32 %v200, %v122
  %v202 = vadd.f32 %v201, %v124
  %v203 = vadd.f32 %v202, %v126
  %v204 = vadd.f32 %v203, %v128
  %v205 = vadd.f32 %v204, %v130
  %v206 = vadd.f32 %v205, %v132
  %v207 = vadd.f32 %v206, %v134
  %v208 = vadd.f32 %v207, %v136
  %v209 = vadd.f32 %v208, %v138
  %v210 = vadd.f32 %v209, %v140
  %v211 = vadd.f32 %v210, %v142
  %v212 = vadd.f32 %v211, %v144
  %v213 = vrot.slane %v212, 4
  %v214 = vadd.f32 %v212, %v213
  %v215 = vrot.slane %v214, 2
  %v216 = vadd.f32 %v214, %v215
  %v217 = vrot.slane %v216, 1
  %v218 = vadd.f32 %v216, %v217
  %v219 = vadd.f32 %v145, %v147
  %v220 = vadd.f32 %v219, %v149
  %v221 = vadd.f32 %v220, %v151
  %v222 = vadd.f32 %v221, %v153
  %v223 = vadd.f32 %v222, %v155
  %v224 = vadd.f32 %v223, %v157
  %v225 = vadd.f32 %v224, %v159
  %v226 = vadd.f32 %v225, %v161
  %v227 = vadd.f32 %v226, %v163
  %v228 = vadd.f32 %v227, %v165
  %v229 = vadd.f32 %v228, %v167
  %v230 = vadd.f32 %v229, %v169
  %v231 = vadd.f32 %v230, %v171
  %v232 = vadd.f32 %v231, %v173
  %v233 = vadd.f32 %v232, %v175
  %v234 = vrot.slane %v233, 4
  %v235 = vadd.f32 %v233, %v234
  %v236 = vrot.slane %v235, 2
  %v237 = vadd.f32 %v235, %v236
  %v238 = vrot.slane %v237, 1
  %v239 = vadd.f32 %v237, %v238
  %v240 = vadd.f32 %v146, %v148
  %v241 = vadd.f32 %v240, %v150
  %v242 = vadd.f32 %v241, %v152
  %v243 = vadd.f32 %v242, %v154
  %v244 = vadd.f32 %v243, %v156
  %v245 = vadd.f32 %v244, %v158
  %v246 = vadd.f32 %v245, %v160
  %v247 = vadd.f32 %v246, %v162
  %v248 = vadd.f32 %v247, %v164
  %v249 = vadd.f32 %v248, %v166
  %v250 = vadd.f32 %v249, %v168
  %v251 = vadd.f32 %v250, %v170
  %v252 = vadd.f32 %v251, %v172
  %v253 = vadd.f32 %v252, %v174
  %v254 = vadd.f32 %v253, %v176
  %v255 = vrot.slane %v254, 4
  %v256 = vadd.f32 %v254, %v255
  %v257 = vrot.slane %v256, 2
  %v258 = vadd.f32 %v256, %v257
  %v259 = vrot.slane %v258, 1
  %v260 = vadd.f32 %v258, %v259
  %v261 = vld [vmem:[%s2] sm:$0xff]
  %v262 = vld [vmem:[%s2 + $0x8] sm:$0xff]
  %v263 = vld [vmem:[%s2 + $0x10] sm:$0xff]
  %v264 = vld [vmem:[%s2 + $0x18] sm:$0xff]
  %v265 = vld [vmem:[%s2 + $0x20] sm:$0xff]
  %v266 = vld [vmem:[%s2 + $0x28] sm:$0xff]
  %v267 = vld [vmem:[%s2 + $0x30] sm:$0xff]
  %v268 = vld [vmem:[%s2 + $0x38] sm:$0xff]
  %v269 = vld [vmem:[%s2 + $0x40] sm:$0xff]
  %v270 = vld [vmem:[%s2 + $0x48] sm:$0xff]
  %v271 = vld [vmem:[%s2 + $0x50] sm:$0xff]
  %v272 = vld [vmem:[%s2 + $0x58] sm:$0xff]
  %v273 = vld [vmem:[%s2 + $0x60] sm:$0xff]
  %v274 = vld [vmem:[%s2 + $0x68] sm:$0xff]
  %v275 = vld [vmem:[%s2 + $0x70] sm:$0xff]
  %v276 = vld [vmem:[%s2 + $0x78] sm:$0xff]
  %v277 = vld [vmem:[%s2 + $0x80] sm:$0xff]
  %v278 = vld [vmem:[%s2 + $0x88] sm:$0xff]
  %v279 = vld [vmem:[%s2 + $0x90] sm:$0xff]
  %v280 = vld [vmem:[%s2 + $0x98] sm:$0xff]
  %v281 = vld [vmem:[%s2 + $0xa0] sm:$0xff]
  %v282 = vld [vmem:[%s2 + $0xa8] sm:$0xff]
  %v283 = vld [vmem:[%s2 + $0xb0] sm:$0xff]
  %v284 = vld [vmem:[%s2 + $0xb8] sm:$0xff]
  %v285 = vld [vmem:[%s2 + $0xc0] sm:$0xff]
  %v286 = vld [vmem:[%s2 + $0xc8] sm:$0xff]
  %v287 = vld [vmem:[%s2 + $0xd0] sm:$0xff]
  %v288 = vld [vmem:[%s2 + $0xd8] sm:$0xff]
  %v289 = vld [vmem:[%s2 + $0xe0] sm:$0xff]
  %v290 = vld [vmem:[%s2 + $0xe8] sm:$0xff]
  %v291 = vld [vmem:[%s2 + $0xf0] sm:$0xff]
  %v292 = vld [vmem:[%s2 + $0xf8] sm:$0xff]
  %vm297 = vcmask 1041409
  %v298 = vsel %vm297, %v239, %v197
  %v299 = vsel %vm297, %v260, %v218
  %302 = vmatprep.subr.mxu0 0.0
  %303 = vmatpush1.msra.mxu0 %v261
  %304 = vmatprep.subr.mxu0 0.0
  %305 = vmatpush1.msra.mxu0 %v262
  %306 = vmatprep.subr.mxu0 0.0
  %307 = vmatpush1.msra.mxu0 %v263
  %308 = vmatprep.subr.mxu0 0.0
  %309 = vmatpush1.msra.mxu0 %v264
  %310 = vmatprep.subr.mxu0 0.0
  %311 = vmatpush1.msra.mxu0 %v265
  %312 = vmatprep.subr.mxu0 0.0
  %313 = vmatpush1.msra.mxu0 %v266
  %314 = vmatprep.subr.mxu0 0.0
  %315 = vmatpush1.msra.mxu0 %v267
  %316 = vmatprep.subr.mxu0 0.0
  %317 = vmatpush1.msra.mxu0 %v268
  %318 = vmatprep.subr.mxu0 0.0
  %319 = vmatpush1.msra.mxu0 %v269
  %320 = vmatprep.subr.mxu0 0.0
  %321 = vmatpush1.msra.mxu0 %v270
  %322 = vmatprep.subr.mxu0 0.0
  %323 = vmatpush1.msra.mxu0 %v271
  %324 = vmatprep.subr.mxu0 0.0
  %325 = vmatpush1.msra.mxu0 %v272
  %326 = vmatprep.subr.mxu0 0.0
  %327 = vmatpush1.msra.mxu0 %v273
  %328 = vmatprep.subr.mxu0 0.0
  %329 = vmatpush1.msra.mxu0 %v274
  %330 = vmatprep.subr.mxu0 0.0
  %331 = vmatpush1.msra.mxu0 %v275
  %332 = vmatprep.subr.mxu0 0.0
  %333 = vmatpush1.msra.mxu0 %v276
  %334 = vmatprep.subr.mxu0 0.0
  %335 = vmatpush1.msra.mxu0 %v277
  %336 = vmatprep.subr.mxu0 0.0
  %337 = vmatpush1.msra.mxu0 %v278
  %338 = vmatprep.subr.mxu0 0.0
  %339 = vmatpush1.msra.mxu0 %v279
  %340 = vmatprep.subr.mxu0 0.0
  %341 = vmatpush1.msra.mxu0 %v280
  %342 = vmatprep.subr.mxu0 0.0
  %343 = vmatpush1.msra.mxu0 %v281
  %344 = vmatprep.subr.mxu0 0.0
  %345 = vmatpush1.msra.mxu0 %v282
  %346 = vmatprep.subr.mxu0 0.0
  %347 = vmatpush1.msra.mxu0 %v283
  %348 = vmatprep.subr.mxu0 0.0
  %349 = vmatpush1.msra.mxu0 %v284
  %350 = vmatprep.subr.mxu0 0.0
  %351 = vmatpush1.msra.mxu0 %v285
  %352 = vmatprep.subr.mxu0 0.0
  %353 = vmatpush1.msra.mxu0 %v286
  %354 = vmatprep.subr.mxu0 0.0
  %355 = vmatpush1.msra.mxu0 %v287
  %356 = vmatprep.subr.mxu0 0.0
  %357 = vmatpush1.msra.mxu0 %v288
  %358 = vmatprep.subr.mxu0 0.0
  %359 = vmatpush1.msra.mxu0 %v289
  %360 = vmatprep.subr.mxu0 0.0
  %361 = vmatpush1.msra.mxu0 %v290
  %362 = vmatprep.subr.mxu0 0.0
  %363 = vmatpush1.msra.mxu0 %v291
  %364 = vmatprep.subr.mxu0 0.0
  %365 = vmatpush1.msra.mxu0 %v292
  %366 = vmatprep.mubr.f32.mxu0 %v299
  %367 = vmatmul.mubr.f32.gmra.mrb[0].mxu0 %v298
  %v368 = vpop.f32.mrb[0].mxu0
  %v369 = vadd.f32 0.0, %v368
  %v370 = vpop.f32.mrb[0].mxu0
  %371 = vdwg.mxu0
  %v374 = vunpack.c.l.s4 1966171168
  %v375 = vunpack.c.0.s8 %v374
  %v376 = vlaneseq
  %v377 = vshrl.u32 %v376, 7
  %v378 = vsub.s32 %v375, %v377
  %v379 = vrot.slane %v369, %v378
  %v380 = vcombine.high %v379, %v379
  %v382 = vunpack.c.l.s4 1966171168
  %v383 = vunpack.c.0.s8 %v382
  %v384 = vlaneseq
  %v385 = vshrl.u32 %v384, 7
  %v386 = vsub.s32 %v383, %v385
  %v387 = vrot.slane %v379, %v386
  %v389 = vunpack.c.l.s4 1966171168
  %v390 = vunpack.c.0.s8 %v389
  %v391 = vlaneseq
  %v392 = vshrl.u32 %v391, 7
  %v393 = vsub.s32 %v390, %v392
  %v394 = vrot.slane %v380, %v393
  %v395 = vlaneseq
  %v396 = vshrl.u32 %v395, 7
  %v397 = vsub.s32 0, %v396
  %v398 = vrot.slane %v369, %v397
  %400 = vbcast.lane.b32.xlu0 %v398, 256
  %v401 = vpop.permute.xlu0 %400
  %s403 = sor.u32 256, 8
  %404 = vbcast.lane.b32.xlu0 %v398, %s403
  %v405 = vpop.permute.xlu0 %404
  %v406 = vlaneseq
  %v407 = vshrl.u32 %v406, 7
  %v408 = vsub.s32 1, %v407
  %v409 = vrot.slane %v369, %v408
  %411 = vbcast.lane.b32.xlu0 %v409, 256
  %v412 = vpop.permute.xlu0 %411
  %s414 = sor.u32 256, 8
  %415 = vbcast.lane.b32.xlu0 %v409, %s414
  %v416 = vpop.permute.xlu0 %415
  %v417 = vlaneseq
  %v418 = vshrl.u32 %v417, 7
  %v419 = vsub.s32 0, %v418
  %v420 = vrot.slane %v387, %v419
  %v421 = vlaneseq
  %v422 = vshrl.u32 %v421, 7
  %v423 = vsub.s32 0, %v422
  %v424 = vrot.slane %v394, %v423
  %vm427 = vcmp.gt.f32.partialorder %v420, %v401
  %vm428 = vcmp.gt.f32.partialorder %v420, %v405
  %vm429 = vcmp.gt.f32.partialorder %v424, %v412
  %vm430 = vcmp.gt.f32.partialorder %v424, %v416
  %v431 = vsel %vm427, 1, 0
  %v432 = vsel %vm428, 1, 0
  %v433 = vsel %vm429, 1, 0
  %v434 = vsel %vm430, 1, 0
  %v435 = vcvt.s32.f32 %v431
  %v436 = vcvt.s32.f32 %v432
  %v437 = vcvt.s32.f32 %v433
  %v438 = vcvt.s32.f32 %v434
  %vm439 = vcmask 130048
  %v440 = vsel %vm439, %v435, 0.0
  %441 = vadd.xlane.f32.xlu0 %v440
  %v442 = vpop.xlane.xlu0 %441
  %v443 = vsel %vm439, %v436, 0.0
  %444 = vadd.xlane.f32.xlu0 %v443
  %v445 = vpop.xlane.xlu0 %444
  %v446 = vsel %vm439, %v437, 0.0
  %447 = vadd.xlane.f32.xlu0 %v446
  %v448 = vpop.xlane.xlu0 %447
  %v449 = vsel %vm439, %v438, 0.0
  %450 = vadd.xlane.f32.xlu0 %v449
  %v451 = vpop.xlane.xlu0 %450
  %vm452 = vcmp.lt.f32.partialorder %v442, 4.0
  %vm453 = vcmp.lt.f32.partialorder %v445, 4.0
  %vm454 = vcmp.lt.f32.partialorder %v448, 4.0
  %vm455 = vcmp.lt.f32.partialorder %v451, 4.0
  %v456 = vlaneseq
  %v457 = vshrl.u32 %v456, 7
  %v458 = vsub.s32 0, %v457
  %v459 = vrot.slane %v369, %v458
  %461 = vbcast.lane.b32.xlu0 %v459, 256
  %v462 = vpop.permute.xlu0 %461
  %s464 = sor.u32 256, 8
  %465 = vbcast.lane.b32.xlu0 %v459, %s464
  %v466 = vpop.permute.xlu0 %465
  %v467 = vlaneseq
  %v468 = vshrl.u32 %v467, 7
  %v469 = vsub.s32 1, %v468
  %v470 = vrot.slane %v369, %v469
  %472 = vbcast.lane.b32.xlu0 %v470, 256
  %v473 = vpop.permute.xlu0 %472
  %s475 = sor.u32 256, 8
  %476 = vbcast.lane.b32.xlu0 %v470, %s475
  %v477 = vpop.permute.xlu0 %476
  %v482 = vsel %vm452, %v462, 0.0
  %v483 = vsel %vm453, %v466, 0.0
  %v484 = vsel %vm454, %v473, 0.0
  %v485 = vsel %vm455, %v477, 0.0
  %v486 = vld [vmem:[%s3] sm:$0xff]
  %v487 = vld [vmem:[%s3 + $0x8] sm:$0xff]
  %v488 = vld [vmem:[%s3 + $0x10] sm:$0xff]
  %v489 = vld [vmem:[%s3 + $0x18] sm:$0xff]
  %494 = vset.pattern.permute.xlu0 0
  %495 = vperm.xlu0 %494, %v482
  %v496 = vpop.permute.xlu0 %495
  %497 = vset.pattern.permute.xlu0 0
  %498 = vperm.xlu0 %497, %v483
  %v499 = vpop.permute.xlu0 %498
  %500 = vset.pattern.permute.xlu0 0
  %501 = vperm.xlu0 %500, %v484
  %v502 = vpop.permute.xlu0 %501
  %503 = vset.pattern.permute.xlu0 0
  %504 = vperm.xlu0 %503, %v485
  %v505 = vpop.permute.xlu0 %504
  %v506 = vlaneseq
  %v507 = vand.u32 %v506, 127
  %v508 = vlaneseq
  %v509 = vshrl.u32 %v508, 7
  %v510 = vsub.s32 %v507, %v509
  %v511 = vrot.slane %v496, %v510
  %v512 = vadd.s32 %v507, 4294967288
  %v513 = vlaneseq
  %v514 = vshrl.u32 %v513, 7
  %v515 = vsub.s32 %v512, %v514
  %v516 = vrot.slane %v499, %v515
  %vm517 = vcmask 130112
  %v518 = vsel %vm517, %v516, %v511
  %v519 = vlaneseq
  %v520 = vshrl.u32 %v519, 7
  %v521 = vsub.s32 %v507, %v520
  %v522 = vrot.slane %v502, %v521
  %v523 = vlaneseq
  %v524 = vshrl.u32 %v523, 7
  %v525 = vsub.s32 %v512, %v524
  %v526 = vrot.slane %v505, %v525
  %v527 = vsel %vm517, %v526, %v522
  %v528 = vsel %vm297, %v527, %v518
  %v529 = vsel %vm439, %v528, 0
  %531 = vmatprep.subr.mxu0 %v487
  %532 = vmatpush1.msra.mxu0 %v486
  %533 = vmatprep.subr.mxu0 %v489
  %534 = vmatpush1.msra.mxu0 %v488
  %535 = vmatprep.subr.mxu0 0.0
  %536 = vmatpush1.msra.mxu0 0.0
  %537 = vmatprep.subr.mxu0 0.0
  %538 = vmatpush1.msra.mxu0 0.0
  %539 = vmatprep.subr.mxu0 0.0
  %540 = vmatpush1.msra.mxu0 0.0
  %541 = vmatprep.subr.mxu0 0.0
  %542 = vmatpush1.msra.mxu0 0.0
  %543 = vmatprep.subr.mxu0 0.0
  %544 = vmatpush1.msra.mxu0 0.0
  %545 = vmatprep.subr.mxu0 0.0
  %546 = vmatpush1.msra.mxu0 0.0
  %547 = vmatprep.subr.mxu0 0.0
  %548 = vmatpush1.msra.mxu0 0.0
  %549 = vmatprep.subr.mxu0 0.0
  %550 = vmatpush1.msra.mxu0 0.0
  %551 = vmatprep.subr.mxu0 0.0
  %552 = vmatpush1.msra.mxu0 0.0
  %553 = vmatprep.subr.mxu0 0.0
  %554 = vmatpush1.msra.mxu0 0.0
  %555 = vmatprep.subr.mxu0 0.0
  %556 = vmatpush1.msra.mxu0 0.0
  %557 = vmatprep.subr.mxu0 0.0
  %558 = vmatpush1.msra.mxu0 0.0
  %559 = vmatprep.subr.mxu0 0.0
  %560 = vmatpush1.msra.mxu0 0.0
  %561 = vmatprep.subr.mxu0 0.0
  %562 = vmatpush1.msra.mxu0 0.0
  %563 = vmatprep.subr.mxu0 0.0
  %564 = vmatpush1.msra.mxu0 0.0
  %565 = vmatprep.subr.mxu0 0.0
  %566 = vmatpush1.msra.mxu0 0.0
  %567 = vmatprep.subr.mxu0 0.0
  %568 = vmatpush1.msra.mxu0 0.0
  %569 = vmatprep.subr.mxu0 0.0
  %570 = vmatpush1.msra.mxu0 0.0
  %571 = vmatprep.subr.mxu0 0.0
  %572 = vmatpush1.msra.mxu0 0.0
  %573 = vmatprep.subr.mxu0 0.0
  %574 = vmatpush1.msra.mxu0 0.0
  %575 = vmatprep.subr.mxu0 0.0
  %576 = vmatpush1.msra.mxu0 0.0
  %577 = vmatprep.subr.mxu0 0.0
  %578 = vmatpush1.msra.mxu0 0.0
  %579 = vmatprep.subr.mxu0 0.0
  %580 = vmatpush1.msra.mxu0 0.0
  %581 = vmatprep.subr.mxu0 0.0
  %582 = vmatpush1.msra.mxu0 0.0
  %583 = vmatprep.subr.mxu0 0.0
  %584 = vmatpush1.msra.mxu0 0.0
  %585 = vmatprep.subr.mxu0 0.0
  %586 = vmatpush1.msra.mxu0 0.0
  %587 = vmatprep.subr.mxu0 0.0
  %588 = vmatpush1.msra.mxu0 0.0
  %589 = vmatprep.subr.mxu0 0.0
  %590 = vmatpush1.msra.mxu0 0.0
  %591 = vmatprep.subr.mxu0 0.0
  %592 = vmatpush1.msra.mxu0 0.0
  %593 = vmatprep.subr.mxu0 0.0
  %594 = vmatpush1.msra.mxu0 0.0
  %595 = vmatprep.mubr.f32.mxu0 0.0
  %596 = vmatmul.mubr.f32.gmra.mrb[0].mxu0 %v529
  %v597 = vpop.f32.mrb[0].mxu0
  %v598 = vadd.f32 0.0, %v597
  %v599 = vpop.f32.mrb[0].mxu0
  %v600 = vadd.f32 0.0, %v599
  %601 = vdwg.mxu0
  %v604 = vcombine.low %v598, %v600
  %v606 = vunpack.c.l.s4 1966171168
  %v607 = vunpack.c.0.s8 %v606
  %v608 = vlaneseq
  %v609 = vshrl.u32 %v608, 7
  %v610 = vsub.s32 %v607, %v609
  %v611 = vrot.slane %v604, %v610
  %v612 = vcombine.high %v611, %v611
  %v614 = vunpack.c.l.s4 1966171168
  %v615 = vunpack.c.0.s8 %v614
  %v616 = vlaneseq
  %v617 = vshrl.u32 %v616, 7
  %v618 = vsub.s32 %v615, %v617
  %v619 = vrot.slane %v611, %v618
  %v621 = vunpack.c.l.s4 1966171168
  %v622 = vunpack.c.0.s8 %v621
  %v623 = vlaneseq
  %v624 = vshrl.u32 %v623, 7
  %v625 = vsub.s32 %v622, %v624
  %v626 = vrot.slane %v612, %v625
  %v627 = vlaneseq
  %v628 = vshrl.u32 %v627, 7
  %v629 = vsub.s32 0, %v628
  %v630 = vrot.slane %v619, %v629
  %v631 = vlaneseq
  %v632 = vshrl.u32 %v631, 7
  %v633 = vsub.s32 1, %v632
  %v634 = vrot.slane %v619, %v633
  %v635 = vlaneseq
  %v636 = vshrl.u32 %v635, 7
  %v637 = vsub.s32 0, %v636
  %v638 = vrot.slane %v626, %v637
  %v639 = vlaneseq
  %v640 = vshrl.u32 %v639, 7
  %v641 = vsub.s32 1, %v640
  %v642 = vrot.slane %v626, %v641
  %v647 = vmul.f32 %v17, %v630
  %v648 = vmul.f32 %v18, %v634
  %v649 = vmul.f32 %v19, %v630
  %v650 = vmul.f32 %v20, %v634
  %v651 = vmul.f32 %v21, %v630
  %v652 = vmul.f32 %v22, %v634
  %v653 = vmul.f32 %v23, %v630
  %v654 = vmul.f32 %v24, %v634
  %v655 = vmul.f32 %v25, %v630
  %v656 = vmul.f32 %v26, %v634
  %v657 = vmul.f32 %v27, %v630
  %v658 = vmul.f32 %v28, %v634
  %v659 = vmul.f32 %v29, %v630
  %v660 = vmul.f32 %v30, %v634
  %v661 = vmul.f32 %v31, %v630
  %v662 = vmul.f32 %v32, %v634
  %v663 = vmul.f32 %v33, %v630
  %v664 = vmul.f32 %v34, %v634
  %v665 = vmul.f32 %v35, %v630
  %v666 = vmul.f32 %v36, %v634
  %v667 = vmul.f32 %v37, %v630
  %v668 = vmul.f32 %v38, %v634
  %v669 = vmul.f32 %v39, %v630
  %v670 = vmul.f32 %v40, %v634
  %v671 = vmul.f32 %v41, %v630
  %v672 = vmul.f32 %v42, %v634
  %v673 = vmul.f32 %v43, %v630
  %v674 = vmul.f32 %v44, %v634
  %v675 = vmul.f32 %v45, %v630
  %v676 = vmul.f32 %v46, %v634
  %v677 = vmul.f32 %v47, %v630
  %v678 = vmul.f32 %v48, %v634
  %v679 = vmul.f32 %v49, %v638
  %v680 = vmul.f32 %v50, %v642
  %v681 = vmul.f32 %v51, %v638
  %v682 = vmul.f32 %v52, %v642
  %v683 = vmul.f32 %v53, %v638
  %v684 = vmul.f32 %v54, %v642
  %v685 = vmul.f32 %v55, %v638
  %v686 = vmul.f32 %v56, %v642
  %v687 = vmul.f32 %v57, %v638
  %v688 = vmul.f32 %v58, %v642
  %v689 = vmul.f32 %v59, %v638
  %v690 = vmul.f32 %v60, %v642
  %v691 = vmul.f32 %v61, %v638
  %v692 = vmul.f32 %v62, %v642
  %v693 = vmul.f32 %v63, %v638
  %v694 = vmul.f32 %v64, %v642
  %v695 = vmul.f32 %v65, %v638
  %v696 = vmul.f32 %v66, %v642
  %v697 = vmul.f32 %v67, %v638
  %v698 = vmul.f32 %v68, %v642
  %v699 = vmul.f32 %v69, %v638
  %v700 = vmul.f32 %v70, %v642
  %v701 = vmul.f32 %v71, %v638
  %v702 = vmul.f32 %v72, %v642
  %v703 = vmul.f32 %v73, %v638
  %v704 = vmul.f32 %v74, %v642
  %v705 = vmul.f32 %v75, %v638
  %v706 = vmul.f32 %v76, %v642
  %v707 = vmul.f32 %v77, %v638
  %v708 = vmul.f32 %v78, %v642
  %v709 = vmul.f32 %v79, %v638
  %v710 = vmul.f32 %v80, %v642
  %711 = vst [vmem:[%s4] sm:$0xff] %v647
  %712 = vst [vmem:[%s4 + $0x8] sm:$0xff] %v648
  %713 = vst [vmem:[%s4 + $0x10] sm:$0xff] %v649
  %714 = vst [vmem:[%s4 + $0x18] sm:$0xff] %v650
  %715 = vst [vmem:[%s4 + $0x20] sm:$0xff] %v651
  %716 = vst [vmem:[%s4 + $0x28] sm:$0xff] %v652
  %717 = vst [vmem:[%s4 + $0x30] sm:$0xff] %v653
  %718 = vst [vmem:[%s4 + $0x38] sm:$0xff] %v654
  %719 = vst [vmem:[%s4 + $0x40] sm:$0xff] %v655
  %720 = vst [vmem:[%s4 + $0x48] sm:$0xff] %v656
  %721 = vst [vmem:[%s4 + $0x50] sm:$0xff] %v657
  %722 = vst [vmem:[%s4 + $0x58] sm:$0xff] %v658
  %723 = vst [vmem:[%s4 + $0x60] sm:$0xff] %v659
  %724 = vst [vmem:[%s4 + $0x68] sm:$0xff] %v660
  %725 = vst [vmem:[%s4 + $0x70] sm:$0xff] %v661
  %726 = vst [vmem:[%s4 + $0x78] sm:$0xff] %v662
  %727 = vst [vmem:[%s4 + $0x80] sm:$0xff] %v663
  %728 = vst [vmem:[%s4 + $0x88] sm:$0xff] %v664
  %729 = vst [vmem:[%s4 + $0x90] sm:$0xff] %v665
  %730 = vst [vmem:[%s4 + $0x98] sm:$0xff] %v666
  %731 = vst [vmem:[%s4 + $0xa0] sm:$0xff] %v667
  %732 = vst [vmem:[%s4 + $0xa8] sm:$0xff] %v668
  %733 = vst [vmem:[%s4 + $0xb0] sm:$0xff] %v669
  %734 = vst [vmem:[%s4 + $0xb8] sm:$0xff] %v670
  %735 = vst [vmem:[%s4 + $0xc0] sm:$0xff] %v671
  %736 = vst [vmem:[%s4 + $0xc8] sm:$0xff] %v672
  %737 = vst [vmem:[%s4 + $0xd0] sm:$0xff] %v673
  %738 = vst [vmem:[%s4 + $0xd8] sm:$0xff] %v674
  %739 = vst [vmem:[%s4 + $0xe0] sm:$0xff] %v675
  %740 = vst [vmem:[%s4 + $0xe8] sm:$0xff] %v676
  %741 = vst [vmem:[%s4 + $0xf0] sm:$0xff] %v677
  %742 = vst [vmem:[%s4 + $0xf8] sm:$0xff] %v678
  %743 = vst [vmem:[%s4 + $0x100] sm:$0xff] %v679
  %744 = vst [vmem:[%s4 + $0x108] sm:$0xff] %v680
  %745 = vst [vmem:[%s4 + $0x110] sm:$0xff] %v681
  %746 = vst [vmem:[%s4 + $0x118] sm:$0xff] %v682
  %747 = vst [vmem:[%s4 + $0x120] sm:$0xff] %v683
  %748 = vst [vmem:[%s4 + $0x128] sm:$0xff] %v684
  %749 = vst [vmem:[%s4 + $0x130] sm:$0xff] %v685
  %750 = vst [vmem:[%s4 + $0x138] sm:$0xff] %v686
  %751 = vst [vmem:[%s4 + $0x140] sm:$0xff] %v687
  %752 = vst [vmem:[%s4 + $0x148] sm:$0xff] %v688
  %753 = vst [vmem:[%s4 + $0x150] sm:$0xff] %v689
  %754 = vst [vmem:[%s4 + $0x158] sm:$0xff] %v690
  %755 = vst [vmem:[%s4 + $0x160] sm:$0xff] %v691
  %756 = vst [vmem:[%s4 + $0x168] sm:$0xff] %v692
  %757 = vst [vmem:[%s4 + $0x170] sm:$0xff] %v693
  %758 = vst [vmem:[%s4 + $0x178] sm:$0xff] %v694
  %759 = vst [vmem:[%s4 + $0x180] sm:$0xff] %v695
  %760 = vst [vmem:[%s4 + $0x188] sm:$0xff] %v696
  %761 = vst [vmem:[%s4 + $0x190] sm:$0xff] %v697
  %762 = vst [vmem:[%s4 + $0x198] sm:$0xff] %v698
  %763 = vst [vmem:[%s4 + $0x1a0] sm:$0xff] %v699
  %764 = vst [vmem:[%s4 + $0x1a8] sm:$0xff] %v700
  %765 = vst [vmem:[%s4 + $0x1b0] sm:$0xff] %v701
  %766 = vst [vmem:[%s4 + $0x1b8] sm:$0xff] %v702
  %767 = vst [vmem:[%s4 + $0x1c0] sm:$0xff] %v703
  %768 = vst [vmem:[%s4 + $0x1c8] sm:$0xff] %v704
  %769 = vst [vmem:[%s4 + $0x1d0] sm:$0xff] %v705
  %770 = vst [vmem:[%s4 + $0x1d8] sm:$0xff] %v706
  %771 = vst [vmem:[%s4 + $0x1e0] sm:$0xff] %v707
  %772 = vst [vmem:[%s4 + $0x1e8] sm:$0xff] %v708
  %773 = vst [vmem:[%s4 + $0x1f0] sm:$0xff] %v709
  %774 = vst [vmem:[%s4 + $0x1f8] sm:$0xff] %v710
  // Predicated region
  $region18: #{gate_forward.1} parent=0 // pred_check
    _
  $region19: #{gate_forward.1} parent=0 // pred_check_branch
    %776 = sbr.rel (0) target = $region21
  $region20: #{gate_forward.1} parent=0 // pred_region
    _
  $region21: #{gate_forward.1} parent=0 // pred_fallthru
    _
  // Predicated region
  $region22: #{gate_forward.1} parent=0 // pred_check
    _
  $region23: #{gate_forward.1} parent=0 // pred_check_branch
    %778 = sbr.rel (0) target = $region25
  $region24: #{gate_forward.1} parent=0 // pred_region
    _
  $region25: #{gate_forward.1} parent=0 // pred_fallthru
    _

</llo_original>
